<compile_context>
chip_gen: v6e
topology: v6e:2x2x1
jax: 0.10.0
libtpu: 0.0.40
codegen_flags: <defaults>
</compile_context>

<pallas_src>
import jax
import jax.numpy as jnp
from jax.experimental import pallas as pl
from jax.experimental.pallas import tpu as pltpu


def _round_up(x, m):
    return ((x + m - 1) // m) * m


def _critic_kernel(state_ref, action_ref,
                   w1_ref, b1_ref,
                   w2a_ref, w2b_ref, b2_ref,
                   w3_ref, b3_ref,
                   out_ref):
    f32 = jnp.float32
    wdt = w1_ref.dtype  # MXU compute dtype (f32 or bf16); casts are no-ops for f32

    # Layer 1: (TB, S) @ (S, Hp) + (1, Hp) -> relu             (MXU + VPU)
    x1 = jnp.dot(state_ref[...].astype(wdt), w1_ref[...],
                 preferred_element_type=f32)
    x1 = jnp.maximum(x1 + b1_ref[...], 0.0)

    # Layer 2 on cat([x1, action]) == x1 @ W2a + action @ W2b  (MXU + VPU)
    x2 = jnp.dot(x1.astype(wdt), w2a_ref[...], preferred_element_type=f32)
    x2 = x2 + jnp.dot(action_ref[...].astype(wdt), w2b_ref[...],
                      preferred_element_type=f32)
    x2 = jnp.maximum(x2 + b2_ref[...], 0.0)

    # Layer 3: q[t] = sum_j x2[t, j] * w3[0, j] + b3
    # VPU multiply + cross-lane reduce (XLU) instead of an N=1 MXU matmul.
    q = jnp.sum(x2 * w3_ref[...].astype(f32), axis=-1, keepdims=True)
    out_ref[...] = (q + b3_ref[...]).astype(out_ref.dtype)


def pack_critic_params(params, weight_dtype=jnp.bfloat16):
    """One-time packing of PyTorch-layout Critic params into kernel layout.

    Input (PyTorch layout):
      w1 (H, S), b1 (H,), w2 (H//2, H+A), b2 (H//2,), w3 (1, H//2), b3 (1,)
    Output: pre-transposed (in, out) weights, W2 split for the concat, hidden
    dims zero-padded to multiples of 128, weights in `weight_dtype`,
    biases kept in f32. Zero padding is inert through bias-add and ReLU.
    """
    w1, b1, w2, b2, w3, b3 = (params[k] for k in ("w1", "b1", "w2", "b2", "w3", "b3"))
    H = w1.shape[0]
    H2 = w2.shape[0]
    Hp = _round_up(H, 128)
    H2p = _round_up(H2, 128)

    def pad_to(x, shape):
        return jnp.pad(x, [(0, t - s) for s, t in zip(x.shape, shape)])

    return {
        "w1": pad_to(w1.T, (w1.shape[1], Hp)).astype(weight_dtype),               # (S, Hp)
        "b1": pad_to(b1.reshape(1, H), (1, Hp)).astype(jnp.float32),              # (1, Hp)
        "w2a": pad_to(w2[:, :H].T, (Hp, H2p)).astype(weight_dtype),               # (Hp, H2p)
        "w2b": pad_to(w2[:, H:].T, (w2.shape[1] - H, H2p)).astype(weight_dtype),  # (A, H2p)
        "b2": pad_to(b2.reshape(1, H2), (1, H2p)).astype(jnp.float32),            # (1, H2p)
        "w3": pad_to(w3.reshape(1, H2), (1, H2p)).astype(weight_dtype),           # (1, H2p)
        "b3": b3.reshape(1, 1).astype(jnp.float32),                               # (1, 1)
    }


def critic_forward(state, action, packed, *, tile_batch=512):
    """state: (B, S) f32, action: (B, A) f32, packed: pack_critic_params(...).
    Returns q: (B, 1) f32."""
    B, S = state.shape
    A = action.shape[1]
    w1, b1, w2a, w2b, b2, w3, b3 = (packed[k] for k in
                                    ("w1", "b1", "w2a", "w2b", "b2", "w3", "b3"))
    Hp = w1.shape[1]
    H2p = w2a.shape[1]

    # Batch tile: as large as tile_batch (multiple of 8; default 512 keeps the
    # 256-row MXU face fed on v6e/v7x) but never bigger than the padded batch.
    tb = min(tile_batch, _round_up(B, 8))
    Bp = _round_up(B, tb)
    if Bp != B:
        state = jnp.pad(state, ((0, Bp - B), (0, 0)))
        action = jnp.pad(action, ((0, Bp - B), (0, 0)))
    n_tiles = Bp // tb

    flops = 2 * Bp * (S * Hp + Hp * H2p + A * H2p + H2p)
    weight_bytes = sum(int(x.size) * x.dtype.itemsize
                       for x in (w1, b1, w2a, w2b, b2, w3, b3))
    bytes_accessed = Bp * (S + A) * 4 + Bp * 4 + weight_bytes

    def batch_spec(feat):
        return pl.BlockSpec((tb, feat), lambda i: (i, 0))

    def resident(arr):
        # Full-array block, constant index_map -> loaded once, stays in VMEM.
        return pl.BlockSpec(arr.shape, lambda i: (0, 0))

    q = pl.pallas_call(
        _critic_kernel,
        out_shape=jax.ShapeDtypeStruct((Bp, 1), jnp.float32),
        grid_spec=pltpu.PrefetchScalarGridSpec(
            num_scalar_prefetch=0,
            grid=(n_tiles,),
            in_specs=[
                batch_spec(S),                 # state  (streamed over batch)
                batch_spec(A),                 # action (streamed over batch)
                resident(w1), resident(b1),
                resident(w2a), resident(w2b), resident(b2),
                resident(w3), resident(b3),
            ],
            out_specs=pl.BlockSpec((tb, 1), lambda i: (i, 0)),
        ),
        compiler_params=pltpu.CompilerParams(
            dimension_semantics=("parallel",),
            vmem_limit_bytes=32 * 1024 * 1024,
        ),
        cost_estimate=pl.CostEstimate(
            flops=flops, transcendentals=0, bytes_accessed=bytes_accessed),
    )(state, action, w1, b1, w2a, w2b, b2, w3, b3)

    return q[:B]


def init_critic_params(key, state_dim, action_dim, hidden_dim=400):
    """Deterministic init matching the module's shapes (xavier_uniform weights;
    PyTorch-default uniform biases replaced by zeros for simplicity)."""
    k1, k2, k3 = jax.random.split(key, 3)

    def xavier(k, fan_out, fan_in):
        limit = jnp.sqrt(6.0 / (fan_in + fan_out))
        return jax.random.uniform(k, (fan_out, fan_in), jnp.float32, -limit, limit)

    h2 = hidden_dim // 2
    return {
        "w1": xavier(k1, hidden_dim, state_dim),
        "b1": jnp.zeros((hidden_dim,), jnp.float32),
        "w2": xavier(k2, h2, hidden_dim + action_dim),
        "b2": jnp.zeros((h2,), jnp.float32),
        "w3": xavier(k3, 1, h2),
        "b3": jnp.zeros((1,), jnp.float32),
    }


def critic_reference(state, action, params):
    """Pure-JAX reference (mirrors the PyTorch module exactly)."""
    x = jnp.maximum(state @ params["w1"].T + params["b1"], 0.0)
    x = jnp.concatenate([x, action], axis=1)
    x = jnp.maximum(x @ params["w2"].T + params["b2"], 0.0)
    return x @ params["w3"].T + params["b3"]


if __name__ == "__main__":
    B, STATE_DIM, ACTION_DIM, HIDDEN = 8, 24, 6, 32

    key = jax.random.PRNGKey(0)
    kp, ks, ka = jax.random.split(key, 3)
    params = init_critic_params(kp, STATE_DIM, ACTION_DIM, HIDDEN)
    state = jax.random.normal(ks, (B, STATE_DIM), jnp.float32)
    action = jax.random.normal(ka, (B, ACTION_DIM), jnp.float32)

    q_ref = critic_reference(state, action, params)

    # 1) f32-packed weights: must match the PyTorch-semantics reference tightly
    #    (verifies the W2 split, padding and VPU-reduction layer 3 are exact).
    packed_f32 = pack_critic_params(params, weight_dtype=jnp.float32)
    q_f32 = jax.block_until_ready(critic_forward(state, action, packed_f32))
    assert q_f32.shape == (B, 1), q_f32.shape
    assert jnp.allclose(q_f32, q_ref, atol=1e-4, rtol=1e-4), (q_f32, q_ref)

    # 2) default packing (bf16 weights + bf16 MXU inputs, f32 accumulate):
    #    sanity-check the reduced-precision path runs and stays close.
    packed_bf16 = pack_critic_params(params)
    q_bf16 = jax.block_until_ready(critic_forward(state, action, packed_bf16))
    assert jnp.allclose(q_bf16, q_f32, atol=1e-1, rtol=1e-1), (q_bf16, q_f32)

    print("KERNEL_OK")
</pallas_src>

<mosaic_0001>
module attributes {stable_mosaic.version = 11 : i64} {
  func.func @_critic_kernel(%arg0: i32, %arg1: memref<8x24xf32, #tpu.memory_space<vmem>>, %arg2: memref<8x6xf32, #tpu.memory_space<vmem>>, %arg3: memref<24x128xf32, #tpu.memory_space<vmem>>, %arg4: memref<1x128xf32, #tpu.memory_space<vmem>>, %arg5: memref<128x128xf32, #tpu.memory_space<vmem>>, %arg6: memref<6x128xf32, #tpu.memory_space<vmem>>, %arg7: memref<1x128xf32, #tpu.memory_space<vmem>>, %arg8: memref<1x128xf32, #tpu.memory_space<vmem>>, %arg9: memref<1x1xf32, #tpu.memory_space<vmem>>, %arg10: memref<8x1xf32, #tpu.memory_space<vmem>>) attributes {dimension_semantics = [#tpu.dimension_semantics<parallel>], iteration_bounds = array<i64: 1>, scalar_prefetch = 0 : i64, scratch_operands = 0 : i64, tpu.core_type = #tpu.core_type<tc>, window_params = [{transform_indices = @transform_0, window_bounds = array<i64: 8, 24>}, {transform_indices = @transform_1, window_bounds = array<i64: 8, 6>}, {pipeline_mode = #tpu.pipeline_mode<synchronous>, transform_indices = @transform_2, window_bounds = array<i64: 24, 128>}, {pipeline_mode = #tpu.pipeline_mode<synchronous>, transform_indices = @transform_3, window_bounds = array<i64: 1, 128>}, {pipeline_mode = #tpu.pipeline_mode<synchronous>, transform_indices = @transform_4, window_bounds = array<i64: 128, 128>}, {pipeline_mode = #tpu.pipeline_mode<synchronous>, transform_indices = @transform_5, window_bounds = array<i64: 6, 128>}, {pipeline_mode = #tpu.pipeline_mode<synchronous>, transform_indices = @transform_6, window_bounds = array<i64: 1, 128>}, {pipeline_mode = #tpu.pipeline_mode<synchronous>, transform_indices = @transform_7, window_bounds = array<i64: 1, 128>}, {pipeline_mode = #tpu.pipeline_mode<synchronous>, transform_indices = @transform_8, window_bounds = array<i64: 1, 1>}, {transform_indices = @transform_9, window_bounds = array<i64: 8, 1>}]} {
    %c0 = arith.constant 0 : index
    %c0_0 = arith.constant 0 : index
    %0 = vector.load %arg1[%c0, %c0_0] : memref<8x24xf32, #tpu.memory_space<vmem>>, vector<8x24xf32>
    %c0_1 = arith.constant 0 : index
    %c0_2 = arith.constant 0 : index
    %1 = vector.load %arg3[%c0_1, %c0_2] : memref<24x128xf32, #tpu.memory_space<vmem>>, vector<24x128xf32>
    %cst = arith.constant dense<0.000000e+00> : vector<8x128xf32>
    %2 = tpu.matmul %0, %1, %cst {dimension_numbers = #tpu.dot_dimension_numbers<[1], [0], [0], [1], [0, 0, 1, 1], [], []>} : vector<8x24xf32>, vector<24x128xf32>, vector<8x128xf32> -> vector<8x128xf32>
    %c0_3 = arith.constant 0 : index
    %c0_4 = arith.constant 0 : index
    %3 = vector.load %arg4[%c0_3, %c0_4] : memref<1x128xf32, #tpu.memory_space<vmem>>, vector<1x128xf32>
    %4 = vector.broadcast %3 : vector<1x128xf32> to vector<8x128xf32>
    %5 = arith.addf %2, %4 : vector<8x128xf32>
    %cst_5 = arith.constant 0.000000e+00 : f32
    %6 = vector.broadcast %cst_5 : f32 to vector<8x128xf32>
    %7 = arith.maximumf %5, %6 : vector<8x128xf32>
    %c0_6 = arith.constant 0 : index
    %c0_7 = arith.constant 0 : index
    %8 = vector.load %arg5[%c0_6, %c0_7] : memref<128x128xf32, #tpu.memory_space<vmem>>, vector<128x128xf32>
    %cst_8 = arith.constant dense<0.000000e+00> : vector<8x128xf32>
    %9 = tpu.matmul %7, %8, %cst_8 {dimension_numbers = #tpu.dot_dimension_numbers<[1], [0], [0], [1], [0, 0, 1, 1], [], []>} : vector<8x128xf32>, vector<128x128xf32>, vector<8x128xf32> -> vector<8x128xf32>
    %c0_9 = arith.constant 0 : index
    %c0_10 = arith.constant 0 : index
    %10 = vector.load %arg2[%c0_9, %c0_10] : memref<8x6xf32, #tpu.memory_space<vmem>>, vector<8x6xf32>
    %c0_11 = arith.constant 0 : index
    %c0_12 = arith.constant 0 : index
    %11 = vector.load %arg6[%c0_11, %c0_12] : memref<6x128xf32, #tpu.memory_space<vmem>>, vector<6x128xf32>
    %cst_13 = arith.constant dense<0.000000e+00> : vector<8x128xf32>
    %12 = tpu.matmul %10, %11, %cst_13 {dimension_numbers = #tpu.dot_dimension_numbers<[1], [0], [0], [1], [0, 0, 1, 1], [], []>} : vector<8x6xf32>, vector<6x128xf32>, vector<8x128xf32> -> vector<8x128xf32>
    %13 = arith.addf %9, %12 : vector<8x128xf32>
    %c0_14 = arith.constant 0 : index
    %c0_15 = arith.constant 0 : index
    %14 = vector.load %arg7[%c0_14, %c0_15] : memref<1x128xf32, #tpu.memory_space<vmem>>, vector<1x128xf32>
    %15 = vector.broadcast %14 : vector<1x128xf32> to vector<8x128xf32>
    %16 = arith.addf %13, %15 : vector<8x128xf32>
    %cst_16 = arith.constant 0.000000e+00 : f32
    %17 = vector.broadcast %cst_16 : f32 to vector<8x128xf32>
    %18 = arith.maximumf %16, %17 : vector<8x128xf32>
    %c0_17 = arith.constant 0 : index
    %c0_18 = arith.constant 0 : index
    %19 = vector.load %arg8[%c0_17, %c0_18] : memref<1x128xf32, #tpu.memory_space<vmem>>, vector<1x128xf32>
    %20 = vector.broadcast %19 : vector<1x128xf32> to vector<8x128xf32>
    %21 = arith.mulf %18, %20 : vector<8x128xf32>
    %cst_19 = arith.constant dense<0.000000e+00> : vector<8xf32>
    %22 = vector.multi_reduction <add>, %21, %cst_19 [1] : vector<8x128xf32> to vector<8xf32>
    %23 = vector.shape_cast %22 : vector<8xf32> to vector<8x1xf32>
    %c0_20 = arith.constant 0 : index
    %c0_21 = arith.constant 0 : index
    %24 = vector.load %arg9[%c0_20, %c0_21] : memref<1x1xf32, #tpu.memory_space<vmem>>, vector<1x1xf32>
    %25 = vector.broadcast %24 : vector<1x1xf32> to vector<8x1xf32>
    %26 = arith.addf %23, %25 : vector<8x1xf32>
    %c0_22 = arith.constant 0 : index
    %c0_23 = arith.constant 0 : index
    %27 = vector.load %arg10[%c0_22, %c0_23] : memref<8x1xf32, #tpu.memory_space<vmem>>, vector<8x1xf32>
    tpu.vector_store %arg10[%c0_22, %c0_23], %26 {strides = array<i32>} : memref<8x1xf32, #tpu.memory_space<vmem>>, vector<8x1xf32>,
    return
  }
  func.func @transform_0(%arg0: i32) -> (i32, i32) {
    %c0_i32 = arith.constant 0 : i32
    %c0_i32_0 = arith.constant 0 : i32
    return %arg0, %c0_i32 : i32, i32
  }
  func.func @transform_1(%arg0: i32) -> (i32, i32) {
    %c0_i32 = arith.constant 0 : i32
    %c0_i32_0 = arith.constant 0 : i32
    return %arg0, %c0_i32 : i32, i32
  }
  func.func @transform_2(%arg0: i32) -> (i32, i32) {
    %c0_i32 = arith.constant 0 : i32
    %c0_i32_0 = arith.constant 0 : i32
    %c0_i32_1 = arith.constant 0 : i32
    return %c0_i32, %c0_i32_0 : i32, i32
  }
  func.func @transform_3(%arg0: i32) -> (i32, i32) {
    %c0_i32 = arith.constant 0 : i32
    %c0_i32_0 = arith.constant 0 : i32
    %c0_i32_1 = arith.constant 0 : i32
    return %c0_i32, %c0_i32_0 : i32, i32
  }
  func.func @transform_4(%arg0: i32) -> (i32, i32) {
    %c0_i32 = arith.constant 0 : i32
    %c0_i32_0 = arith.constant 0 : i32
    %c0_i32_1 = arith.constant 0 : i32
    return %c0_i32, %c0_i32_0 : i32, i32
  }
  func.func @transform_5(%arg0: i32) -> (i32, i32) {
    %c0_i32 = arith.constant 0 : i32
    %c0_i32_0 = arith.constant 0 : i32
    %c0_i32_1 = arith.constant 0 : i32
    return %c0_i32, %c0_i32_0 : i32, i32
  }
  func.func @transform_6(%arg0: i32) -> (i32, i32) {
    %c0_i32 = arith.constant 0 : i32
    %c0_i32_0 = arith.constant 0 : i32
    %c0_i32_1 = arith.constant 0 : i32
    return %c0_i32, %c0_i32_0 : i32, i32
  }
  func.func @transform_7(%arg0: i32) -> (i32, i32) {
    %c0_i32 = arith.constant 0 : i32
    %c0_i32_0 = arith.constant 0 : i32
    %c0_i32_1 = arith.constant 0 : i32
    return %c0_i32, %c0_i32_0 : i32, i32
  }
  func.func @transform_8(%arg0: i32) -> (i32, i32) {
    %c0_i32 = arith.constant 0 : i32
    %c0_i32_0 = arith.constant 0 : i32
    %c0_i32_1 = arith.constant 0 : i32
    return %c0_i32, %c0_i32_0 : i32, i32
  }
  func.func @transform_9(%arg0: i32) -> (i32, i32) {
    %c0_i32 = arith.constant 0 : i32
    %c0_i32_0 = arith.constant 0 : i32
    return %arg0, %c0_i32 : i32, i32
  }
}

</mosaic_0001>

<llo_original>
// kernel: tpu_custom_call.1
$region0: #{tpu_custom_call.1}
  #allocation0 [shape = 'u32[]', space=smem, size = 0x4, offset = 0x4, fixed_abs, tag = 'smem constant byte address 0x4 - core index']
  #allocation1 [shape = 'u32[144,128]{1,0:T(1,128)}', space=vmem, size = 0x12000, scoped, tag = 'internal scratch']
  #allocation2 [shape = 'f32[1,1]{1,0:T(1,128)S(1)}', space=vmem, size = 0x200, scoped, tag = 'scoped memory for tpu_custom_call.1']
  %s0 = inlined_call_operand.hbm [shape: f32[8,24], index: 0, kind: input, shape index: {}]
  %s1 = inlined_call_operand.hbm [shape: f32[8,6], index: 1, kind: input, shape index: {}]
  %s2 = inlined_call_operand.hbm [shape: f32[24,128], index: 2, kind: input, shape index: {}]
  %s3 = inlined_call_operand.vmem [shape: f32[1,128], index: 3, kind: input, shape index: {}]
  %s4 = inlined_call_operand.hbm [shape: f32[128,128], index: 4, kind: input, shape index: {}]
  %s5 = inlined_call_operand.vmem [shape: f32[6,128], index: 5, kind: input, shape index: {}]
  %s6 = inlined_call_operand.vmem [shape: f32[1,128], index: 6, kind: input, shape index: {}]
  %s7 = inlined_call_operand.vmem [shape: f32[1,128], index: 7, kind: input, shape index: {}]
  %s8 = inlined_call_operand.<no memory space> [shape: f32[1,1], index: 8, kind: input, shape index: {}]
  %s9 = inlined_call_operand.vmem [shape: f32[8,1], index: 9, kind: output, shape index: {}]
  %s10 = sld [smem:[#allocation0]]
  $region62: #{tpu_custom_call.1} parent=0
    _
  %s12 = ssub.s32 1, %s10
  %s13 = scalar_select 0, %s12, %s10
  %v14 = vstv %s8
  %15 = vst [vmem:[#allocation2] sm:$0x1] %v14
  $region1: #{tpu_custom_call.1} parent=0
    #allocation3 [shape = 'u8[4096]{0}', space=vmem, size = 0x1000, scoped, tag = 'input window, operand 0, single buffered']
    #allocation4 [shape = 's32[1]{0}', space=sflag, size = 0x4, scoped, tag = 'scoped memory for tpu_custom_call.1']
    #allocation5 [shape = 'u8[4096]{0}', space=vmem, size = 0x1000, scoped, tag = 'input window, operand 1, single buffered']
    #allocation6 [shape = 's32[1]{0}', space=sflag, size = 0x4, scoped, tag = 'scoped memory for tpu_custom_call.1']
    #allocation7 [shape = 'u8[12288]{0}', space=vmem, size = 0x3000, scoped, tag = 'input window, operand 2, single buffered']
    #allocation8 [shape = 'u8[65536]{0}', space=vmem, size = 0x10000, scoped, tag = 'input window, operand 4, single buffered']
    #allocation9 [shape = 's32[1]{0}', space=sflag, size = 0x4, scoped, tag = 'scoped memory for tpu_custom_call.1']
    %16 = vsyncpa [#allocation4], 0
    %17 = vsyncpa [#allocation6], 0
    %18 = vsyncpa [#allocation9], 0
    // Predicated region
    $region2: #{tpu_custom_call.1} parent=1 // pred_check
      _
    $region3: #{tpu_custom_call.1} parent=1 // pred_check_branch
      %20 = sbr.rel (0) target = $region5
    $region4: #{tpu_custom_call.1} parent=1 // pred_region
      %s22 = ssub.s32 128, 128
      %23 = vsyncadd [#allocation4], %s22
      %s25 = sshll.u32 [#allocation3], 4
      %s26 = int_to_ptr.vmem [resolvable:$true] %s25
      %28 = dma.hbm_to_vmem [thread:$0]  %s0, 128, %s26, [#allocation4]
    $region5: #{tpu_custom_call.1} parent=1 // pred_fallthru
      _
    // Predicated region
    $region6: #{tpu_custom_call.1} parent=1 // pred_check
      _
    $region7: #{tpu_custom_call.1} parent=1 // pred_check_branch
      %30 = sbr.rel (0) target = $region9
    $region8: #{tpu_custom_call.1} parent=1 // pred_region
      %s32 = ssub.s32 128, 128
      %33 = vsyncadd [#allocation6], %s32
      %s35 = sshll.u32 [#allocation5], 4
      %s36 = int_to_ptr.vmem [resolvable:$true] %s35
      %38 = dma.hbm_to_vmem [thread:$0]  %s1, 128, %s36, [#allocation6]
    $region9: #{tpu_custom_call.1} parent=1 // pred_fallthru
      _
    // Predicated region
    $region10: #{tpu_custom_call.1} parent=1 // pred_check
      _
    $region11: #{tpu_custom_call.1} parent=1 // pred_check_branch
      %40 = sbr.rel (0) target = $region13
    $region12: #{tpu_custom_call.1} parent=1 // pred_region
      %s42 = ssub.s32 384, 384
      %43 = vsyncadd [#allocation6], %s42
      %s44 = sshll.u32 [#allocation7], 4
      %s45 = int_to_ptr.vmem [resolvable:$true] %s44
      %50 = dma.hbm_to_vmem [thread:$0]  %s2, 384, %s45, [#allocation6], 128, 128, 8
    $region13: #{tpu_custom_call.1} parent=1 // pred_fallthru
      _
    // Predicated region
    $region14: #{tpu_custom_call.1} parent=1 // pred_check
      _
    $region15: #{tpu_custom_call.1} parent=1 // pred_check_branch
      %52 = sbr.rel (0) target = $region17
    $region16: #{tpu_custom_call.1} parent=1 // pred_region
      _
    $region17: #{tpu_custom_call.1} parent=1 // pred_fallthru
      _
    // Predicated region
    $region18: #{tpu_custom_call.1} parent=1 // pred_check
      _
    $region19: #{tpu_custom_call.1} parent=1 // pred_check_branch
      %54 = sbr.rel (0) target = $region21
    $region20: #{tpu_custom_call.1} parent=1 // pred_region
      %s56 = ssub.s32 2048, 2048
      %57 = vsyncadd [#allocation9], %s56
      %s58 = sshll.u32 [#allocation8], 4
      %s59 = int_to_ptr.vmem [resolvable:$true] %s58
      %64 = dma.hbm_to_vmem [thread:$0]  %s4, 2048, %s59, [#allocation9], 128, 128, 8
    $region21: #{tpu_custom_call.1} parent=1 // pred_fallthru
      _
    // Predicated region
    $region22: #{tpu_custom_call.1} parent=1 // pred_check
      _
    $region23: #{tpu_custom_call.1} parent=1 // pred_check_branch
      %66 = sbr.rel (0) target = $region25
    $region24: #{tpu_custom_call.1} parent=1 // pred_region
      _
    $region25: #{tpu_custom_call.1} parent=1 // pred_fallthru
      _
    // Predicated region
    $region26: #{tpu_custom_call.1} parent=1 // pred_check
      _
    $region27: #{tpu_custom_call.1} parent=1 // pred_check_branch
      %68 = sbr.rel (0) target = $region29
    $region28: #{tpu_custom_call.1} parent=1 // pred_region
      _
    $region29: #{tpu_custom_call.1} parent=1 // pred_fallthru
      _
    // Predicated region
    $region30: #{tpu_custom_call.1} parent=1 // pred_check
      _
    $region31: #{tpu_custom_call.1} parent=1 // pred_check_branch
      %70 = sbr.rel (0) target = $region33
    $region32: #{tpu_custom_call.1} parent=1 // pred_region
      _
    $region33: #{tpu_custom_call.1} parent=1 // pred_fallthru
      _
    // Predicated region
    $region34: #{tpu_custom_call.1} parent=1 // pred_check
      _
    $region35: #{tpu_custom_call.1} parent=1 // pred_check_branch
      %72 = sbr.rel (0) target = $region37
    $region36: #{tpu_custom_call.1} parent=1 // pred_region
      _
    $region37: #{tpu_custom_call.1} parent=1 // pred_fallthru
      _
    // Predicated region
    $region38: #{tpu_custom_call.1} parent=1 // pred_check
      _
    $region39: #{tpu_custom_call.1} parent=1 // pred_check_branch
      %74 = sbr.rel (0) target = $region41
    $region40: #{tpu_custom_call.1} parent=1 // pred_region
      %75 = dma.done [#allocation4], 128
    $region41: #{tpu_custom_call.1} parent=1 // pred_fallthru
      _
    // Predicated region
    $region42: #{tpu_custom_call.1} parent=1 // pred_check
      _
    $region43: #{tpu_custom_call.1} parent=1 // pred_check_branch
      %77 = sbr.rel (0) target = $region45
    $region44: #{tpu_custom_call.1} parent=1 // pred_region
      %78 = dma.done [#allocation6], 128
    $region45: #{tpu_custom_call.1} parent=1 // pred_fallthru
      _
    // Predicated region
    $region46: #{tpu_custom_call.1} parent=1 // pred_check
      _
    $region47: #{tpu_custom_call.1} parent=1 // pred_check_branch
      %80 = sbr.rel (0) target = $region49
    $region48: #{tpu_custom_call.1} parent=1 // pred_region
      %81 = dma.done [#allocation6], 384
    $region49: #{tpu_custom_call.1} parent=1 // pred_fallthru
      _
    // Predicated region
    $region50: #{tpu_custom_call.1} parent=1 // pred_check
      _
    $region51: #{tpu_custom_call.1} parent=1 // pred_check_branch
      %83 = sbr.rel (0) target = $region53
    $region52: #{tpu_custom_call.1} parent=1 // pred_region
      %84 = dma.done [#allocation9], 2048
    $region53: #{tpu_custom_call.1} parent=1 // pred_fallthru
      _
    %v85 = vld [vmem:[#allocation3] sm:$0xff]
    %v86 = vld [vmem:[#allocation7] sm:$0xff]
    %v87 = vld [vmem:[#allocation7 + $0x8] sm:$0xff]
    %v88 = vld [vmem:[#allocation7 + $0x10] sm:$0xff]
    %v89 = vld [vmem:[%s3] sm:$0x1]
    %v91 = vlaneseq
    %v92 = vshrl.u32 %v91, 7
    %v93 = vsub.s32 0, %v92
    %v94 = vrot.slane %v89, %v93
    %vm96 = vcmask 195584
    %v98 = vsel %vm96, %v85, 0
    %100 = vmatprep.subr.mxu0 0.0
    %101 = vmatpush1.msra.mxu0 0.0
    %102 = vmatprep.subr.mxu0 0.0
    %103 = vmatpush1.msra.mxu0 0.0
    %104 = vmatprep.subr.mxu0 0.0
    %105 = vmatpush1.msra.mxu0 0.0
    %106 = vmatprep.subr.mxu0 0.0
    %107 = vmatpush1.msra.mxu0 0.0
    %108 = vmatprep.subr.mxu0 0.0
    %109 = vmatpush1.msra.mxu0 0.0
    %110 = vmatprep.subr.mxu0 0.0
    %111 = vmatpush1.msra.mxu0 0.0
    %112 = vmatprep.subr.mxu0 0.0
    %113 = vmatpush1.msra.mxu0 0.0
    %114 = vmatprep.subr.mxu0 0.0
    %115 = vmatpush1.msra.mxu0 0.0
    %116 = vmatprep.subr.mxu0 0.0
    %117 = vmatpush1.msra.mxu0 0.0
    %118 = vmatprep.subr.mxu0 0.0
    %119 = vmatpush1.msra.mxu0 0.0
    %120 = vmatprep.subr.mxu0 0.0
    %121 = vmatpush1.msra.mxu0 0.0
    %122 = vmatprep.subr.mxu0 0.0
    %123 = vmatpush1.msra.mxu0 0.0
    %124 = vmatprep.subr.mxu0 0.0
    %125 = vmatpush1.msra.mxu0 0.0
    %126 = vmatprep.subr.mxu0 0.0
    %127 = vmatpush1.msra.mxu0 %v88
    %128 = vmatprep.subr.mxu0 0.0
    %129 = vmatpush1.msra.mxu0 %v87
    %130 = vmatprep.subr.mxu0 0.0
    %131 = vmatpush1.msra.mxu0 %v86
    %132 = vmatprep.subr.mxu0 0.0
    %133 = vmatpush2.msra.mxu0 0.0
    %134 = vmatprep.subr.mxu0 0.0
    %135 = vmatpush2.msra.mxu0 0.0
    %136 = vmatprep.subr.mxu0 0.0
    %137 = vmatpush2.msra.mxu0 0.0
    %138 = vmatprep.subr.mxu0 0.0
    %139 = vmatpush2.msra.mxu0 0.0
    %140 = vmatprep.subr.mxu0 0.0
    %141 = vmatpush2.msra.mxu0 0.0
    %142 = vmatprep.subr.mxu0 0.0
    %143 = vmatpush2.msra.mxu0 0.0
    %144 = vmatprep.subr.mxu0 0.0
    %145 = vmatpush2.msra.mxu0 0.0
    %146 = vmatprep.subr.mxu0 0.0
    %147 = vmatpush2.msra.mxu0 0.0
    %148 = vmatprep.subr.mxu0 0.0
    %149 = vmatpush2.msra.mxu0 0.0
    %150 = vmatprep.subr.mxu0 0.0
    %151 = vmatpush2.msra.mxu0 0.0
    %152 = vmatprep.subr.mxu0 0.0
    %153 = vmatpush2.msra.mxu0 0.0
    %154 = vmatprep.subr.mxu0 0.0
    %155 = vmatpush2.msra.mxu0 0.0
    %156 = vmatprep.subr.mxu0 0.0
    %157 = vmatpush2.msra.mxu0 0.0
    %158 = vmatprep.subr.mxu0 0.0
    %159 = vmatpush2.msra.mxu0 0.0
    %160 = vmatprep.subr.mxu0 0.0
    %161 = vmatpush2.msra.mxu0 0.0
    %162 = vmatprep.subr.mxu0 0.0
    %163 = vmatpush2.msra.mxu0 0.0
    %164 = vmatprep.mubr.f32.mxu0 0.0
    %165 = vmatmul.mubr.f32.gmra.mxu0 %v98
    %v166 = vpop.f32.mrf.mxu0
    %v167 = vadd.f32 %v94, %v166
    %v168 = vpop.f32.mrf.mxu0
    %169 = vdwg.mxu0
    %v170 = vmax.f32 %v167, 0.0
    %v171 = vld [vmem:[#allocation8] sm:$0xff]
    %v172 = vld [vmem:[#allocation8 + $0x8] sm:$0xff]
    %v173 = vld [vmem:[#allocation8 + $0x10] sm:$0xff]
    %v174 = vld [vmem:[#allocation8 + $0x18] sm:$0xff]
    %v175 = vld [vmem:[#allocation8 + $0x20] sm:$0xff]
    %v176 = vld [vmem:[#allocation8 + $0x28] sm:$0xff]
    %v177 = vld [vmem:[#allocation8 + $0x30] sm:$0xff]
    %v178 = vld [vmem:[#allocation8 + $0x38] sm:$0xff]
    %v179 = vld [vmem:[#allocation8 + $0x40] sm:$0xff]
    %v180 = vld [vmem:[#allocation8 + $0x48] sm:$0xff]
    %v181 = vld [vmem:[#allocation8 + $0x50] sm:$0xff]
    %v182 = vld [vmem:[#allocation8 + $0x58] sm:$0xff]
    %v183 = vld [vmem:[#allocation8 + $0x60] sm:$0xff]
    %v184 = vld [vmem:[#allocation8 + $0x68] sm:$0xff]
    %v185 = vld [vmem:[#allocation8 + $0x70] sm:$0xff]
    %v186 = vld [vmem:[#allocation8 + $0x78] sm:$0xff]
    %v187 = vld [vmem:[#allocation5] sm:$0xff]
    %v188 = vld [vmem:[%s5] sm:$0x3f]
    %vm189 = vcmask 48128
    %v191 = vsel %vm189, %v187, 0
    %vm193 = vcmask 1045504
    %v195 = vsel %vm193, %v188, 0
    %197 = vmatprep.subr.mxu0 0.0
    %198 = vmatpush1.msra.mxu0 0.0
    %199 = vmatprep.subr.mxu0 0.0
    %200 = vmatpush1.msra.mxu0 0.0
    %201 = vmatprep.subr.mxu0 0.0
    %202 = vmatpush1.msra.mxu0 0.0
    %203 = vmatprep.subr.mxu0 0.0
    %204 = vmatpush1.msra.mxu0 0.0
    %205 = vmatprep.subr.mxu0 0.0
    %206 = vmatpush1.msra.mxu0 0.0
    %207 = vmatprep.subr.mxu0 0.0
    %208 = vmatpush1.msra.mxu0 0.0
    %209 = vmatprep.subr.mxu0 0.0
    %210 = vmatpush1.msra.mxu0 0.0
    %211 = vmatprep.subr.mxu0 0.0
    %212 = vmatpush1.msra.mxu0 0.0
    %213 = vmatprep.subr.mxu0 0.0
    %214 = vmatpush1.msra.mxu0 0.0
    %215 = vmatprep.subr.mxu0 0.0
    %216 = vmatpush1.msra.mxu0 0.0
    %217 = vmatprep.subr.mxu0 0.0
    %218 = vmatpush1.msra.mxu0 0.0
    %219 = vmatprep.subr.mxu0 0.0
    %220 = vmatpush1.msra.mxu0 0.0
    %221 = vmatprep.subr.mxu0 0.0
    %222 = vmatpush1.msra.mxu0 0.0
    %223 = vmatprep.subr.mxu0 0.0
    %224 = vmatpush1.msra.mxu0 0.0
    %225 = vmatprep.subr.mxu0 0.0
    %226 = vmatpush1.msra.mxu0 0.0
    %227 = vmatprep.subr.mxu0 0.0
    %228 = vmatpush1.msra.mxu0 %v195
    %229 = vmatprep.subr.mxu0 0.0
    %230 = vmatpush2.msra.mxu0 0.0
    %231 = vmatprep.subr.mxu0 0.0
    %232 = vmatpush2.msra.mxu0 0.0
    %233 = vmatprep.subr.mxu0 0.0
    %234 = vmatpush2.msra.mxu0 0.0
    %235 = vmatprep.subr.mxu0 0.0
    %236 = vmatpush2.msra.mxu0 0.0
    %237 = vmatprep.subr.mxu0 0.0
    %238 = vmatpush2.msra.mxu0 0.0
    %239 = vmatprep.subr.mxu0 0.0
    %240 = vmatpush2.msra.mxu0 0.0
    %241 = vmatprep.subr.mxu0 0.0
    %242 = vmatpush2.msra.mxu0 0.0
    %243 = vmatprep.subr.mxu0 0.0
    %244 = vmatpush2.msra.mxu0 0.0
    %245 = vmatprep.subr.mxu0 0.0
    %246 = vmatpush2.msra.mxu0 0.0
    %247 = vmatprep.subr.mxu0 0.0
    %248 = vmatpush2.msra.mxu0 0.0
    %249 = vmatprep.subr.mxu0 0.0
    %250 = vmatpush2.msra.mxu0 0.0
    %251 = vmatprep.subr.mxu0 0.0
    %252 = vmatpush2.msra.mxu0 0.0
    %253 = vmatprep.subr.mxu0 0.0
    %254 = vmatpush2.msra.mxu0 0.0
    %255 = vmatprep.subr.mxu0 0.0
    %256 = vmatpush2.msra.mxu0 0.0
    %257 = vmatprep.subr.mxu0 0.0
    %258 = vmatpush2.msra.mxu0 0.0
    %259 = vmatprep.subr.mxu0 0.0
    %260 = vmatpush2.msra.mxu0 0.0
    %261 = vmatprep.mubr.f32.mxu0 0.0
    %262 = vmatmul.mubr.f32.gmra.mxu0 %v191
    %v263 = vpop.f32.mrf.mxu0
    %v264 = vadd.f32 0.0, %v263
    %v265 = vpop.f32.mrf.mxu0
    %266 = vdwg.mxu0
    %267 = vmatprep.subr.mxu0 0.0
    %268 = vmatpush1.msra.mxu0 %v186
    %269 = vmatprep.subr.mxu0 0.0
    %270 = vmatpush1.msra.mxu0 %v185
    %271 = vmatprep.subr.mxu0 0.0
    %272 = vmatpush1.msra.mxu0 %v184
    %273 = vmatprep.subr.mxu0 0.0
    %274 = vmatpush1.msra.mxu0 %v183
    %275 = vmatprep.subr.mxu0 0.0
    %276 = vmatpush1.msra.mxu0 %v182
    %277 = vmatprep.subr.mxu0 0.0
    %278 = vmatpush1.msra.mxu0 %v181
    %279 = vmatprep.subr.mxu0 0.0
    %280 = vmatpush1.msra.mxu0 %v180
    %281 = vmatprep.subr.mxu0 0.0
    %282 = vmatpush1.msra.mxu0 %v179
    %283 = vmatprep.subr.mxu0 0.0
    %284 = vmatpush1.msra.mxu0 %v178
    %285 = vmatprep.subr.mxu0 0.0
    %286 = vmatpush1.msra.mxu0 %v177
    %287 = vmatprep.subr.mxu0 0.0
    %288 = vmatpush1.msra.mxu0 %v176
    %289 = vmatprep.subr.mxu0 0.0
    %290 = vmatpush1.msra.mxu0 %v175
    %291 = vmatprep.subr.mxu0 0.0
    %292 = vmatpush1.msra.mxu0 %v174
    %293 = vmatprep.subr.mxu0 0.0
    %294 = vmatpush1.msra.mxu0 %v173
    %295 = vmatprep.subr.mxu0 0.0
    %296 = vmatpush1.msra.mxu0 %v172
    %297 = vmatprep.subr.mxu0 0.0
    %298 = vmatpush1.msra.mxu0 %v171
    %299 = vmatprep.subr.mxu0 0.0
    %300 = vmatpush2.msra.mxu0 0.0
    %301 = vmatprep.subr.mxu0 0.0
    %302 = vmatpush2.msra.mxu0 0.0
    %303 = vmatprep.subr.mxu0 0.0
    %304 = vmatpush2.msra.mxu0 0.0
    %305 = vmatprep.subr.mxu0 0.0
    %306 = vmatpush2.msra.mxu0 0.0
    %307 = vmatprep.subr.mxu0 0.0
    %308 = vmatpush2.msra.mxu0 0.0
    %309 = vmatprep.subr.mxu0 0.0
    %310 = vmatpush2.msra.mxu0 0.0
    %311 = vmatprep.subr.mxu0 0.0
    %312 = vmatpush2.msra.mxu0 0.0
    %313 = vmatprep.subr.mxu0 0.0
    %314 = vmatpush2.msra.mxu0 0.0
    %315 = vmatprep.subr.mxu0 0.0
    %316 = vmatpush2.msra.mxu0 0.0
    %317 = vmatprep.subr.mxu0 0.0
    %318 = vmatpush2.msra.mxu0 0.0
    %319 = vmatprep.subr.mxu0 0.0
    %320 = vmatpush2.msra.mxu0 0.0
    %321 = vmatprep.subr.mxu0 0.0
    %322 = vmatpush2.msra.mxu0 0.0
    %323 = vmatprep.subr.mxu0 0.0
    %324 = vmatpush2.msra.mxu0 0.0
    %325 = vmatprep.subr.mxu0 0.0
    %326 = vmatpush2.msra.mxu0 0.0
    %327 = vmatprep.subr.mxu0 0.0
    %328 = vmatpush2.msra.mxu0 0.0
    %329 = vmatprep.subr.mxu0 0.0
    %330 = vmatpush2.msra.mxu0 0.0
    %331 = vmatprep.mubr.f32.mxu0 0.0
    %332 = vmatmul.mubr.f32.gmra.mxu0 %v170
    %v333 = vpop.f32.mrf.mxu0
    %v334 = vadd.f32 %v264, %v333
    %v335 = vpop.f32.mrf.mxu0
    %336 = vdwg.mxu0
    %v337 = vld [vmem:[%s6] sm:$0x1]
    %v339 = vlaneseq
    %v340 = vshrl.u32 %v339, 7
    %v341 = vsub.s32 0, %v340
    %v342 = vrot.slane %v337, %v341
    %v344 = vadd.f32 %v334, %v342
    %v345 = vmax.f32 %v344, 0.0
    %v346 = vld [vmem:[%s7] sm:$0x1]
    %v348 = vlaneseq
    %v349 = vshrl.u32 %v348, 7
    %v350 = vsub.s32 0, %v349
    %v351 = vrot.slane %v346, %v350
    %v353 = vmul.f32 %v345, %v351
    %354 = vadd.xlane.f32.xlu0 %v353
    %v355 = vpop.xlane.xlu0 %354
    %v356 = vld [vmem:[#allocation2] sm:$0x1]
    %v358 = vlaneseq
    %v359 = vshrl.u32 %v358, 7
    %v360 = vsub.s32 0, %v359
    %v361 = vrot.slane %v356, %v360
    %v363 = vadd.f32 %v355, %v361
    %vm364 = vcmask 7168
    %365 = vst.msk [vmem:[%s9] sm:$0xff] %vm364, %v363
    // Predicated region
    $region54: #{tpu_custom_call.1} parent=1 // pred_check
      _
    $region55: #{tpu_custom_call.1} parent=1 // pred_check_branch
      %367 = sbr.rel (0) target = $region57
    $region56: #{tpu_custom_call.1} parent=1 // pred_region
      _
    $region57: #{tpu_custom_call.1} parent=1 // pred_fallthru
      _
    // Predicated region
    $region58: #{tpu_custom_call.1} parent=1 // pred_check
      _
    $region59: #{tpu_custom_call.1} parent=1 // pred_check_branch
      %369 = sbr.rel (0) target = $region61
    $region60: #{tpu_custom_call.1} parent=1 // pred_region
      _
    $region61: #{tpu_custom_call.1} parent=1 // pred_fallthru
      _
    %370 = vsyncpa [#allocation4], 1
    %371 = vsyncpa [#allocation6], 1
    %372 = vsyncpa [#allocation9], 1

</llo_original>
